<compile_context>
chip_gen: v6e
topology: v6e:2x2x1
jax: 0.10.0
libtpu: 0.0.40
codegen_flags: <defaults>
</compile_context>

<pallas_src>
import numpy as np
import jax
import jax.numpy as jnp
from jax import lax
from jax.experimental import pallas as pl
from jax.experimental.pallas import tpu as pltpu


# ----------------------------------------------------------------------------
# Generation-aware VMEM budget (review: never hard-code 64 MiB, which is all
# of v7x's physical VMEM).
# ----------------------------------------------------------------------------
def _query_vmem_limit():
    try:
        info = pltpu.get_tpu_info()
        cap = getattr(info, "vmem_capacity_bytes", None)
        if cap:
            return (int(cap) * 3) // 4      # ~48 MiB on v7x, ~96 MiB on v5e/v6e
    except Exception:
        pass
    return None                              # fall back to the compiler default


_VMEM_LIMIT = _query_vmem_limit()
_VMEM_BUDGET = _VMEM_LIMIT if _VMEM_LIMIT is not None else (32 << 20)


def _compiler_params(dimension_semantics):
    kwargs = dict(dimension_semantics=dimension_semantics)
    if _VMEM_LIMIT is not None:
        kwargs["vmem_limit_bytes"] = _VMEM_LIMIT
    return pltpu.CompilerParams(**kwargs)


# ----------------------------------------------------------------------------
# Pallas kernel 1: fused pairwise squared distance + radius test + first-K
# neighbour selection.  Emits the final (B, S, K) int32 group indices
# directly (torch: sqrdists > r^2 -> N; sort; [:K]; sentinel -> group_first),
# so the (B, S, N) candidate matrix never touches HBM and the XLA sort is gone.
# ----------------------------------------------------------------------------
def _make_radius_topk_kernel(radius_sq, n_points, tile_s, k_neighbor):
    sentinel = float(n_points)

    def kernel(center_ref, pos_ref, idx_ref):
        c = center_ref[...]                                 # (1, TS, 3) f32
        p = pos_ref[...]                                    # (1, 3, N)  f32
        # 3 VPU multiply-adds per (s, n) element; no zero-filled accumulator.
        diff = c[:, :, 0:1] - p[:, 0:1, :]
        d = diff * diff
        for a in (1, 2):
            diff = c[:, :, a:a + 1] - p[:, a:a + 1, :]
            d = d + diff * diff
        # Candidate = point index if inside the radius, else the sentinel N.
        # Kept in f32 (indices < 2^24 are exact) so the K min-reductions stay
        # on the well-trodden f32 XLU reduce path.
        pid = lax.broadcasted_iota(jnp.int32, (1, tile_s, n_points), 2)
        cand = jnp.where(d <= radius_sq, pid.astype(jnp.float32), sentinel)

        # Iteratively extract the K smallest candidate indices (== ascending
        # sort[:K] of the torch reference; indices are unique so no ties).
        cols = []
        for k in range(k_neighbor):
            cur = jnp.min(cand, axis=-1, keepdims=True)     # (1, TS, 1)
            cols.append(cur)
            if k + 1 < k_neighbor:
                cand = jnp.where(cand <= cur, sentinel, cand)

        # Scatter the K columns into the (1, TS, K) output with lane selects;
        # defaulting every column to cols[0] reproduces torch's
        # sentinel -> group_first replacement for free.
        first = cols[0]
        lane = lax.broadcasted_iota(jnp.int32, (1, tile_s, k_neighbor), 2)
        out = jnp.broadcast_to(first, (1, tile_s, k_neighbor))
        for k in range(1, k_neighbor):
            out = jnp.where((lane == k) & (cols[k] != sentinel), cols[k], out)
        idx_ref[...] = out.astype(jnp.int32)

    return kernel


def _pick_s_tile(s, n):
    budget = _VMEM_BUDGET // 2
    cands = [s] + [t for t in (2048, 1024, 512, 256, 128, 64, 32, 16, 8) if t < s]
    valid = [t for t in cands if s % t == 0 and (t == s or t % 8 == 0)]
    for t in valid:
        if 6 * t * n * 4 <= budget:         # ~6 live (TS, N) f32 temporaries
            return t
    # TODO(synk): for very large N also tile the N axis (carry a running
    # top-K across N tiles) so the (TS, N) temporaries stay inside VMEM.
    return valid[-1] if valid else s


def radius_group_topk(center_pos, pos_t, radius, n_neighbor):
    """center_pos (B,S,3), pos_t (B,3,N) -> (B,S,K) int32 group indices."""
    B, S, _ = center_pos.shape
    N = pos_t.shape[-1]
    TS = _pick_s_tile(S, N)
    flops = int(B * S * N * (9 + 3 * n_neighbor))
    bytes_acc = int(4 * (B * S * 3 + B * 3 * N + B * S * n_neighbor))
    # Batch axis leads the grid so the (1,3,N) pos block's index map is
    # constant across the inner S-tile axis (re-DMA skipped).
    return pl.pallas_call(
        _make_radius_topk_kernel(float(radius) ** 2, N, TS, n_neighbor),
        grid=(B, S // TS),
        out_shape=jax.ShapeDtypeStruct((B, S, n_neighbor), jnp.int32),
        in_specs=[pl.BlockSpec((1, TS, 3), lambda b, s: (b, s, 0)),
                  pl.BlockSpec((1, 3, N), lambda b, s: (b, 0, 0))],
        out_specs=pl.BlockSpec((1, TS, n_neighbor), lambda b, s: (b, s, 0)),
        compiler_params=_compiler_params(("parallel", "parallel")),
        cost_estimate=pl.CostEstimate(flops=flops, transcendentals=0,
                                      bytes_accessed=bytes_acc),
    )(center_pos, pos_t)


# ----------------------------------------------------------------------------
# Pallas kernels 2: PointNetConv = (1x1 conv + training-mode BatchNorm + ReLU)*
# + max-pool over neighbours, as a per-layer pipeline of row-tiled kernels.
# The conv bias is dropped: training-mode BN mean subtraction cancels it.
# ----------------------------------------------------------------------------
def _make_conv_bn_stats_kernel(k_neighbor, has_prev, use_mask):
    def kernel(*refs):
        i = 0
        x_ref = refs[i]; i += 1
        scale_ref = bias_ref = mask_ref = None
        if has_prev:
            scale_ref, bias_ref = refs[i], refs[i + 1]; i += 2
            if use_mask:
                mask_ref = refs[i]; i += 1
        w_ref = refs[i]
        z_ref, sum_ref, sumsq_ref = refs[i + 1], refs[i + 2], refs[i + 3]

        @pl.when(pl.program_id(0) == 0)
        def _():
            sum_ref[...] = jnp.zeros_like(sum_ref)
            sumsq_ref[...] = jnp.zeros_like(sumsq_ref)

        x = x_ref[...]                                       # (K, C_in, T)
        if has_prev:
            # Previous layer's fused BN + ReLU (+ padding mask) applied here,
            # so inter-layer activations cross HBM exactly once (as raw z).
            a = jnp.maximum(x * scale_ref[...] + bias_ref[...], 0.0)
            if use_mask:
                a = a * mask_ref[...]                        # padded cols -> 0
            x = a.astype(jnp.bfloat16)
        w = w_ref[...]                                       # (C_out, C_in) bf16

        psum = None
        psumsq = None
        for k in range(k_neighbor):
            zk = jnp.dot(w, x[k], preferred_element_type=jnp.float32)  # (C_out, T)
            z_ref[k, :, :] = zk
            sk = jnp.sum(zk, axis=1, keepdims=True)          # (C_out, 1)
            qk = jnp.sum(zk * zk, axis=1, keepdims=True)
            psum = sk if psum is None else psum + sk
            psumsq = qk if psumsq is None else psumsq + qk
        sum_ref[...] += psum
        sumsq_ref[...] += psumsq

    return kernel


def _make_bn_relu_maxpool_kernel(k_neighbor):
    def kernel(z_ref, scale_ref, bias_ref, out_ref):
        sc = scale_ref[...][0]                               # (C, 1)
        bi = bias_ref[...][0]
        acc = None
        # Stream BN+ReLU per neighbour slice; never materialize the full
        # (C, K*T) activation (review: halves peak live VMEM on v7x).
        for k in range(k_neighbor):
            a = jnp.maximum(z_ref[k, :, :] * sc + bi, 0.0)   # (C, T)
            acc = a if acc is None else jnp.maximum(acc, a)
        out_ref[...] = acc

    return kernel


def _pick_row_tile(r_pad, k_neighbor, c_in, c_out, budget):
    # Double-buffered x/z blocks plus ~3 live full-size f32 temporaries.
    per_col = (2 * k_neighbor * (c_in + c_out) * 4
               + 3 * k_neighbor * max(c_in, c_out) * 4)
    for t in sorted({r_pad} | {m * 128 for m in (64, 32, 16, 8, 4, 2, 1)},
                    reverse=True):
        if t <= r_pad and r_pad % t == 0 and t * per_col <= budget:
            return t
    return 128


def _conv_bn_stats(x, scale, bias, mask, w, k_neighbor, r_pad):
    has_prev = scale is not None
    use_mask = has_prev and mask is not None
    c_out, c_in = w.shape
    t = _pick_row_tile(r_pad, k_neighbor, c_in, c_out, _VMEM_BUDGET // 2)

    operands = [x]
    in_specs = [pl.BlockSpec((k_neighbor, c_in, t), lambda j: (0, 0, j))]
    if has_prev:
        operands += [scale, bias]
        in_specs += [pl.BlockSpec((1, c_in, 1), lambda j: (0, 0, 0)),
                     pl.BlockSpec((1, c_in, 1), lambda j: (0, 0, 0))]
        if use_mask:
            operands.append(mask)
            in_specs.append(pl.BlockSpec((1, 1, t), lambda j: (0, 0, j)))
    operands.append(w.astype(jnp.bfloat16))
    in_specs.append(pl.BlockSpec((c_out, c_in), lambda j: (0, 0)))

    flops = int(k_neighbor * r_pad * (2 * c_in * c_out + 5 * c_out
                                      + (4 * c_in if has_prev else 0)))
    bytes_acc = int(x.size * x.dtype.itemsize
                    + k_neighbor * c_out * r_pad * 4
                    + c_out * (2 * c_in + 16))

    return pl.pallas_call(
        _make_conv_bn_stats_kernel(k_neighbor, has_prev, use_mask),
        grid=(r_pad // t,),
        out_shape=(jax.ShapeDtypeStruct((k_neighbor, c_out, r_pad), jnp.float32),
                   jax.ShapeDtypeStruct((c_out, 1), jnp.float32),
                   jax.ShapeDtypeStruct((c_out, 1), jnp.float32)),
        in_specs=in_specs,
        out_specs=(pl.BlockSpec((k_neighbor, c_out, t), lambda j: (0, 0, j)),
                   pl.BlockSpec((c_out, 1), lambda j: (0, 0)),
                   pl.BlockSpec((c_out, 1), lambda j: (0, 0))),
        compiler_params=_compiler_params(("arbitrary",)),    # stats accumulate
        cost_estimate=pl.CostEstimate(flops=flops, transcendentals=0,
                                      bytes_accessed=bytes_acc),
    )(*operands)


def _bn_relu_maxpool(z, scale, bias, k_neighbor, r_pad):
    c = z.shape[1]
    t = _pick_row_tile(r_pad, k_neighbor, c, c, _VMEM_BUDGET // 2)
    return pl.pallas_call(
        _make_bn_relu_maxpool_kernel(k_neighbor),
        grid=(r_pad // t,),
        out_shape=jax.ShapeDtypeStruct((c, r_pad), jnp.float32),
        in_specs=[pl.BlockSpec((k_neighbor, c, t), lambda j: (0, 0, j)),
                  pl.BlockSpec((1, c, 1), lambda j: (0, 0, 0)),
                  pl.BlockSpec((1, c, 1), lambda j: (0, 0, 0))],
        out_specs=pl.BlockSpec((c, t), lambda j: (0, j)),
        compiler_params=_compiler_params(("parallel",)),
        cost_estimate=pl.CostEstimate(flops=int(4 * c * k_neighbor * r_pad),
                                      transcendentals=0,
                                      bytes_accessed=int(z.size * 4 + c * r_pad * 4)),
    )(z, scale, bias)


def pointnet_mlp(h0, mask, layer_params, k_neighbor, r_pad, r_real, eps=1e-5):
    """h0 (K, C0, R_pad) bf16 (padded cols zero) -> (C_last, R_pad) f32."""
    # BatchNorm2d stats over the real B*S*K positions; padded columns stay
    # exactly zero (zero input, no conv bias) so they contribute nothing.
    cnt = float(k_neighbor * r_real)
    x, scale, bias = h0, None, None
    for l, (w, gamma, beta) in enumerate(layer_params):
        z, s, ss = _conv_bn_stats(x, scale, bias,
                                  mask if l > 0 else None,
                                  w, k_neighbor, r_pad)
        mean = s / cnt
        var = ss / cnt - mean * mean          # biased batch variance (training BN)
        sc = gamma * lax.rsqrt(var + eps)
        bi = beta - mean * sc
        c_out = w.shape[0]
        scale, bias = sc.reshape(1, c_out, 1), bi.reshape(1, c_out, 1)
        x = z
    return _bn_relu_maxpool(x, scale, bias, k_neighbor, r_pad)


# ----------------------------------------------------------------------------
# Plain-JAX glue: farthest-point sampling and gathers.
# ----------------------------------------------------------------------------
def farthest_point_sample(pos, npoints, init_farthest):
    # TODO(synk): move this loop into a Pallas kernel that keeps the per-batch
    # point cloud resident in VMEM across the S iterations (the fori_loop
    # re-reads pos from HBM every step); plain JAX for now.
    B, N, _ = pos.shape
    batch_idx = jnp.arange(B)

    def body(i, state):
        centroids, distance, farthest = state
        centroids = centroids.at[:, i].set(farthest)
        centroid = pos[batch_idx, farthest][:, None, :]            # (B, 1, 3)
        dist = jnp.sum((pos - centroid) ** 2, axis=-1)             # (B, N)
        distance = jnp.minimum(distance, dist)
        farthest = jnp.argmax(distance, axis=-1).astype(jnp.int32)
        return centroids, distance, farthest

    centroids = jnp.zeros((B, npoints), jnp.int32)
    distance = jnp.full((B, N), 1e10, jnp.float32)
    centroids, _, _ = lax.fori_loop(0, npoints, body,
                                    (centroids, distance, init_farthest))
    return centroids


# ----------------------------------------------------------------------------
# The module
# ----------------------------------------------------------------------------
class SAMSGModule:
    """JAX/Pallas port of the Set-Abstraction Multi-Scale-Grouping layer."""

    def __init__(self, npoints, batch_size, radius_list, n_neighbor_list,
                 mlp_sizes_list, param_key=None):
        self.npoints = npoints
        self.batch_size = batch_size
        self.radius_list = radius_list
        self.n_neighbor_list = n_neighbor_list
        self.mlp_sizes_list = mlp_sizes_list
        key = jax.random.PRNGKey(42) if param_key is None else param_key
        self.params = []                         # per scale: [(w, gamma, beta)]
        for sizes in mlp_sizes_list:
            layer_params = []
            for l in range(1, len(sizes)):
                key, kw = jax.random.split(key)
                cin, cout = sizes[l - 1], sizes[l]
                # PyTorch Conv2d weight (cout, cin, 1, 1) -> (cout, cin).  The
                # conv bias is dropped: under training-mode BatchNorm it is
                # exactly cancelled by the mean subtraction (dead parameter).
                w = jax.random.normal(kw, (cout, cin), jnp.float32) / np.sqrt(cin)
                gamma = jnp.ones((cout, 1), jnp.float32)      # BatchNorm2d defaults
                beta = jnp.zeros((cout, 1), jnp.float32)
                layer_params.append((w, gamma, beta))
            self.params.append(layer_params)

    def __call__(self, pos, feat):
        B, N, _ = pos.shape
        assert B == self.batch_size
        S = self.npoints
        # torch uses torch.randint for the FPS seed point; deterministic here.
        init_far = jax.random.randint(jax.random.PRNGKey(1), (B,), 0, N,
                                      dtype=jnp.int32)
        centroids = farthest_point_sample(pos, S, init_far)
        # DGL node IDs come out sorted by point index, so masked outputs are
        # ordered by centroid point index per batch - reproduce that ordering.
        centroids = jnp.sort(centroids, axis=-1)

        gather = jax.vmap(lambda arr, ind: arr[ind])
        center_pos = gather(pos, centroids)                        # (B, S, 3)
        pos_t = jnp.transpose(pos, (0, 2, 1))                      # (B, 3, N)

        R = B * S
        R_pad = ((R + 127) // 128) * 128                           # lane-dense rows
        if R_pad != R:
            mask = (jnp.arange(R_pad) < R).astype(jnp.float32).reshape(1, 1, R_pad)
        else:
            mask = None                         # review: fold the padding mask away

        feat_res_list = []
        for i in range(len(self.radius_list)):
            K = self.n_neighbor_list[i]
            # Pallas: fused distance + radius test + first-K selection.
            group_idx = radius_group_topk(center_pos, pos_t,
                                          self.radius_list[i], K)  # (B, S, K)
            # TODO(synk): fuse this gather + relayout into the first conv
            # kernel (scalar-prefetch indices + in-kernel sublane gather) to
            # avoid the K-times-larger grouped tensor's HBM round-trip.
            grouped_pos = gather(pos, group_idx)                   # (B, S, K, 3)
            rel = grouped_pos - center_pos[:, :, None, :]          # src.pos - dst.pos
            if feat is not None:
                grouped_feat = gather(feat, group_idx)             # (B, S, K, C0)
                h = jnp.concatenate([rel, grouped_feat], axis=-1)
            else:
                h = rel
            D = h.shape[-1]
            assert D == self.mlp_sizes_list[i][0]
            # (B,S,K,D) -> (K, D, B*S): neighbours on the cheap leading axis,
            # channels on sublanes, rows lane-dense.
            h = jnp.transpose(h, (2, 3, 0, 1)).reshape(K, D, R)
            if R_pad != R:
                h = jnp.pad(h, ((0, 0), (0, 0), (0, R_pad - R)))
            h = h.astype(jnp.bfloat16)
            new_feat = pointnet_mlp(h, mask, self.params[i], K, R_pad, R)
            new_feat = new_feat[:, :R]                             # (C_out, B*S)
            feat_res_list.append(new_feat.T.reshape(B, S, -1))

        pos_res = center_pos                                       # (B, S, 3)
        feat_res = jnp.concatenate(feat_res_list, axis=2)          # (B, S, sum C)
        return pos_res, feat_res


# ----------------------------------------------------------------------------
if __name__ == "__main__":
    key = jax.random.PRNGKey(0)
    # B*S = 128 -> lane-dense rows with no padding mask (review item).
    B, N, C0, S = 2, 128, 4, 64
    radius_list = [0.2, 0.4]
    n_neighbor_list = [8, 16]
    mlp_sizes_list = [[3 + C0, 16, 32], [3 + C0, 16, 32]]

    kp, kf = jax.random.split(key)
    pos = jax.random.uniform(kp, (B, N, 3), jnp.float32)
    feat = jax.random.normal(kf, (B, N, C0), jnp.float32)

    # Exactness check of the fused radius + first-K kernel against the
    # sort-based reference semantics of the torch module.
    r_chk, k_chk = radius_list[0], n_neighbor_list[0]
    centers_chk = pos[:, :S, :]
    g_pallas = radius_group_topk(centers_chk, jnp.transpose(pos, (0, 2, 1)),
                                 r_chk, k_chk)
    d_ref = jnp.sum((centers_chk[:, :, None, :] - pos[:, None, :, :]) ** 2, -1)
    cand_ref = jnp.where(d_ref <= r_chk ** 2,
                         jnp.arange(N, dtype=jnp.int32)[None, None, :], N)
    g_ref = jnp.sort(cand_ref, axis=-1)[:, :, :k_chk]
    g_ref = jnp.where(g_ref == N, g_ref[:, :, :1], g_ref)
    assert bool(jnp.all(g_pallas == g_ref)), "radius top-K kernel mismatch"

    module = SAMSGModule(S, B, radius_list, n_neighbor_list, mlp_sizes_list)
    pos_res, feat_res = module(pos, feat)
    jax.block_until_ready((pos_res, feat_res))

    assert pos_res.shape == (B, S, 3), pos_res.shape
    assert feat_res.shape == (B, S, sum(m[-1] for m in mlp_sizes_list)), feat_res.shape
    assert bool(jnp.all(jnp.isfinite(pos_res))) and bool(jnp.all(jnp.isfinite(feat_res)))
    print("KERNEL_OK")
</pallas_src>

<mosaic_0001>
module attributes {stable_mosaic.version = 11 : i64} {
  func.func @kernel(%arg0: i32, %arg1: i32, %arg2: memref<1x64x3xf32, #tpu.memory_space<vmem>>, %arg3: memref<1x3x128xf32, #tpu.memory_space<vmem>>, %arg4: memref<1x64x8xi32, #tpu.memory_space<vmem>>) attributes {dimension_semantics = [#tpu.dimension_semantics<parallel>, #tpu.dimension_semantics<parallel>], iteration_bounds = array<i64: 2, 1>, scalar_prefetch = 0 : i64, scratch_operands = 0 : i64, tpu.core_type = #tpu.core_type<tc>, window_params = [{transform_indices = @transform_0, window_bounds = array<i64: 1, 64, 3>}, {transform_indices = @transform_1, window_bounds = array<i64: 1, 3, 128>}, {transform_indices = @transform_2, window_bounds = array<i64: 1, 64, 8>}]} {
    %c0 = arith.constant 0 : index
    %c0_0 = arith.constant 0 : index
    %c0_1 = arith.constant 0 : index
    %0 = vector.load %arg2[%c0, %c0_0, %c0_1] : memref<1x64x3xf32, #tpu.memory_space<vmem>>, vector<1x64x3xf32>
    %c0_2 = arith.constant 0 : index
    %c0_3 = arith.constant 0 : index
    %c0_4 = arith.constant 0 : index
    %1 = vector.load %arg3[%c0_2, %c0_3, %c0_4] : memref<1x3x128xf32, #tpu.memory_space<vmem>>, vector<1x3x128xf32>
    %2 = vector.extract_strided_slice %0 {offsets = [0, 0, 0], sizes = [1, 64, 1], strides = [1, 1, 1]} : vector<1x64x3xf32> to vector<1x64x1xf32>
    %3 = vector.extract_strided_slice %1 {offsets = [0, 0, 0], sizes = [1, 1, 128], strides = [1, 1, 1]} : vector<1x3x128xf32> to vector<1x1x128xf32>
    %4 = vector.broadcast %2 : vector<1x64x1xf32> to vector<1x64x128xf32>
    %5 = vector.broadcast %3 : vector<1x1x128xf32> to vector<1x64x128xf32>
    %6 = arith.subf %4, %5 : vector<1x64x128xf32>
    %7 = arith.mulf %6, %6 : vector<1x64x128xf32>
    %8 = vector.extract_strided_slice %0 {offsets = [0, 0, 1], sizes = [1, 64, 1], strides = [1, 1, 1]} : vector<1x64x3xf32> to vector<1x64x1xf32>
    %9 = vector.extract_strided_slice %1 {offsets = [0, 1, 0], sizes = [1, 1, 128], strides = [1, 1, 1]} : vector<1x3x128xf32> to vector<1x1x128xf32>
    %10 = vector.broadcast %8 : vector<1x64x1xf32> to vector<1x64x128xf32>
    %11 = vector.broadcast %9 : vector<1x1x128xf32> to vector<1x64x128xf32>
    %12 = arith.subf %10, %11 : vector<1x64x128xf32>
    %13 = arith.mulf %12, %12 : vector<1x64x128xf32>
    %14 = arith.addf %7, %13 : vector<1x64x128xf32>
    %15 = vector.extract_strided_slice %0 {offsets = [0, 0, 2], sizes = [1, 64, 1], strides = [1, 1, 1]} : vector<1x64x3xf32> to vector<1x64x1xf32>
    %16 = vector.extract_strided_slice %1 {offsets = [0, 2, 0], sizes = [1, 1, 128], strides = [1, 1, 1]} : vector<1x3x128xf32> to vector<1x1x128xf32>
    %17 = vector.broadcast %15 : vector<1x64x1xf32> to vector<1x64x128xf32>
    %18 = vector.broadcast %16 : vector<1x1x128xf32> to vector<1x64x128xf32>
    %19 = arith.subf %17, %18 : vector<1x64x128xf32>
    %20 = arith.mulf %19, %19 : vector<1x64x128xf32>
    %21 = arith.addf %14, %20 : vector<1x64x128xf32>
    %22 = tpu.iota {dimensions = array<i32: 2>} : vector<1x64x128xi32>
    %cst = arith.constant 4.000000e-02 : f32
    %23 = vector.broadcast %cst : f32 to vector<1x64x128xf32>
    %24 = arith.cmpf ole, %21, %23 : vector<1x64x128xf32>
    %25 = arith.sitofp %22 : vector<1x64x128xi32> to vector<1x64x128xf32>
    %cst_5 = arith.constant 1.280000e+02 : f32
    %26 = vector.broadcast %cst_5 : f32 to vector<1x64x128xf32>
    %27 = arith.select %24, %25, %26 : vector<1x64x128xi1>, vector<1x64x128xf32>
    %cst_6 = arith.constant dense<0x7F800000> : vector<1x64xf32>
    %28 = vector.multi_reduction <minimumf>, %27, %cst_6 [2] : vector<1x64x128xf32> to vector<1x64xf32>
    %29 = vector.shape_cast %28 : vector<1x64xf32> to vector<1x64x1xf32>
    %30 = vector.broadcast %29 : vector<1x64x1xf32> to vector<1x64x128xf32>
    %31 = arith.cmpf ole, %27, %30 : vector<1x64x128xf32>
    %cst_7 = arith.constant 1.280000e+02 : f32
    %32 = vector.broadcast %cst_7 : f32 to vector<1x64x128xf32>
    %33 = arith.select %31, %32, %27 : vector<1x64x128xi1>, vector<1x64x128xf32>
    %cst_8 = arith.constant dense<0x7F800000> : vector<1x64xf32>
    %34 = vector.multi_reduction <minimumf>, %33, %cst_8 [2] : vector<1x64x128xf32> to vector<1x64xf32>
    %35 = vector.shape_cast %34 : vector<1x64xf32> to vector<1x64x1xf32>
    %36 = vector.broadcast %35 : vector<1x64x1xf32> to vector<1x64x128xf32>
    %37 = arith.cmpf ole, %33, %36 : vector<1x64x128xf32>
    %cst_9 = arith.constant 1.280000e+02 : f32
    %38 = vector.broadcast %cst_9 : f32 to vector<1x64x128xf32>
    %39 = arith.select %37, %38, %33 : vector<1x64x128xi1>, vector<1x64x128xf32>
    %cst_10 = arith.constant dense<0x7F800000> : vector<1x64xf32>
    %40 = vector.multi_reduction <minimumf>, %39, %cst_10 [2] : vector<1x64x128xf32> to vector<1x64xf32>
    %41 = vector.shape_cast %40 : vector<1x64xf32> to vector<1x64x1xf32>
    %42 = vector.broadcast %41 : vector<1x64x1xf32> to vector<1x64x128xf32>
    %43 = arith.cmpf ole, %39, %42 : vector<1x64x128xf32>
    %cst_11 = arith.constant 1.280000e+02 : f32
    %44 = vector.broadcast %cst_11 : f32 to vector<1x64x128xf32>
    %45 = arith.select %43, %44, %39 : vector<1x64x128xi1>, vector<1x64x128xf32>
    %cst_12 = arith.constant dense<0x7F800000> : vector<1x64xf32>
    %46 = vector.multi_reduction <minimumf>, %45, %cst_12 [2] : vector<1x64x128xf32> to vector<1x64xf32>
    %47 = vector.shape_cast %46 : vector<1x64xf32> to vector<1x64x1xf32>
    %48 = vector.broadcast %47 : vector<1x64x1xf32> to vector<1x64x128xf32>
    %49 = arith.cmpf ole, %45, %48 : vector<1x64x128xf32>
    %cst_13 = arith.constant 1.280000e+02 : f32
    %50 = vector.broadcast %cst_13 : f32 to vector<1x64x128xf32>
    %51 = arith.select %49, %50, %45 : vector<1x64x128xi1>, vector<1x64x128xf32>
    %cst_14 = arith.constant dense<0x7F800000> : vector<1x64xf32>
    %52 = vector.multi_reduction <minimumf>, %51, %cst_14 [2] : vector<1x64x128xf32> to vector<1x64xf32>
    %53 = vector.shape_cast %52 : vector<1x64xf32> to vector<1x64x1xf32>
    %54 = vector.broadcast %53 : vector<1x64x1xf32> to vector<1x64x128xf32>
    %55 = arith.cmpf ole, %51, %54 : vector<1x64x128xf32>
    %cst_15 = arith.constant 1.280000e+02 : f32
    %56 = vector.broadcast %cst_15 : f32 to vector<1x64x128xf32>
    %57 = arith.select %55, %56, %51 : vector<1x64x128xi1>, vector<1x64x128xf32>
    %cst_16 = arith.constant dense<0x7F800000> : vector<1x64xf32>
    %58 = vector.multi_reduction <minimumf>, %57, %cst_16 [2] : vector<1x64x128xf32> to vector<1x64xf32>
    %59 = vector.shape_cast %58 : vector<1x64xf32> to vector<1x64x1xf32>
    %60 = vector.broadcast %59 : vector<1x64x1xf32> to vector<1x64x128xf32>
    %61 = arith.cmpf ole, %57, %60 : vector<1x64x128xf32>
    %cst_17 = arith.constant 1.280000e+02 : f32
    %62 = vector.broadcast %cst_17 : f32 to vector<1x64x128xf32>
    %63 = arith.select %61, %62, %57 : vector<1x64x128xi1>, vector<1x64x128xf32>
    %cst_18 = arith.constant dense<0x7F800000> : vector<1x64xf32>
    %64 = vector.multi_reduction <minimumf>, %63, %cst_18 [2] : vector<1x64x128xf32> to vector<1x64xf32>
    %65 = vector.shape_cast %64 : vector<1x64xf32> to vector<1x64x1xf32>
    %66 = vector.broadcast %65 : vector<1x64x1xf32> to vector<1x64x128xf32>
    %67 = arith.cmpf ole, %63, %66 : vector<1x64x128xf32>
    %cst_19 = arith.constant 1.280000e+02 : f32
    %68 = vector.broadcast %cst_19 : f32 to vector<1x64x128xf32>
    %69 = arith.select %67, %68, %63 : vector<1x64x128xi1>, vector<1x64x128xf32>
    %cst_20 = arith.constant dense<0x7F800000> : vector<1x64xf32>
    %70 = vector.multi_reduction <minimumf>, %69, %cst_20 [2] : vector<1x64x128xf32> to vector<1x64xf32>
    %71 = vector.shape_cast %70 : vector<1x64xf32> to vector<1x64x1xf32>
    %72 = tpu.iota {dimensions = array<i32: 2>} : vector<1x64x8xi32>
    %73 = vector.shape_cast %29 : vector<1x64x1xf32> to vector<1x64x1xf32>
    %74 = vector.broadcast %73 : vector<1x64x1xf32> to vector<1x64x8xf32>
    %c1_i32 = arith.constant 1 : i32
    %75 = vector.broadcast %c1_i32 : i32 to vector<1x64x8xi32>
    %76 = arith.cmpi eq, %72, %75 : vector<1x64x8xi32>
    %cst_21 = arith.constant 1.280000e+02 : f32
    %77 = vector.broadcast %cst_21 : f32 to vector<1x64x1xf32>
    %78 = arith.cmpf one, %35, %77 : vector<1x64x1xf32>
    %79 = vector.broadcast %78 : vector<1x64x1xi1> to vector<1x64x8xi1>
    %80 = arith.andi %76, %79 : vector<1x64x8xi1>
    %81 = vector.shape_cast %35 : vector<1x64x1xf32> to vector<1x64x1xf32>
    %82 = vector.broadcast %81 : vector<1x64x1xf32> to vector<1x64x8xf32>
    %83 = arith.select %80, %82, %74 : vector<1x64x8xi1>, vector<1x64x8xf32>
    %c2_i32 = arith.constant 2 : i32
    %84 = vector.broadcast %c2_i32 : i32 to vector<1x64x8xi32>
    %85 = arith.cmpi eq, %72, %84 : vector<1x64x8xi32>
    %cst_22 = arith.constant 1.280000e+02 : f32
    %86 = vector.broadcast %cst_22 : f32 to vector<1x64x1xf32>
    %87 = arith.cmpf one, %41, %86 : vector<1x64x1xf32>
    %88 = vector.broadcast %87 : vector<1x64x1xi1> to vector<1x64x8xi1>
    %89 = arith.andi %85, %88 : vector<1x64x8xi1>
    %90 = vector.shape_cast %41 : vector<1x64x1xf32> to vector<1x64x1xf32>
    %91 = vector.broadcast %90 : vector<1x64x1xf32> to vector<1x64x8xf32>
    %92 = arith.select %89, %91, %83 : vector<1x64x8xi1>, vector<1x64x8xf32>
    %c3_i32 = arith.constant 3 : i32
    %93 = vector.broadcast %c3_i32 : i32 to vector<1x64x8xi32>
    %94 = arith.cmpi eq, %72, %93 : vector<1x64x8xi32>
    %cst_23 = arith.constant 1.280000e+02 : f32
    %95 = vector.broadcast %cst_23 : f32 to vector<1x64x1xf32>
    %96 = arith.cmpf one, %47, %95 : vector<1x64x1xf32>
    %97 = vector.broadcast %96 : vector<1x64x1xi1> to vector<1x64x8xi1>
    %98 = arith.andi %94, %97 : vector<1x64x8xi1>
    %99 = vector.shape_cast %47 : vector<1x64x1xf32> to vector<1x64x1xf32>
    %100 = vector.broadcast %99 : vector<1x64x1xf32> to vector<1x64x8xf32>
    %101 = arith.select %98, %100, %92 : vector<1x64x8xi1>, vector<1x64x8xf32>
    %c4_i32 = arith.constant 4 : i32
    %102 = vector.broadcast %c4_i32 : i32 to vector<1x64x8xi32>
    %103 = arith.cmpi eq, %72, %102 : vector<1x64x8xi32>
    %cst_24 = arith.constant 1.280000e+02 : f32
    %104 = vector.broadcast %cst_24 : f32 to vector<1x64x1xf32>
    %105 = arith.cmpf one, %53, %104 : vector<1x64x1xf32>
    %106 = vector.broadcast %105 : vector<1x64x1xi1> to vector<1x64x8xi1>
    %107 = arith.andi %103, %106 : vector<1x64x8xi1>
    %108 = vector.shape_cast %53 : vector<1x64x1xf32> to vector<1x64x1xf32>
    %109 = vector.broadcast %108 : vector<1x64x1xf32> to vector<1x64x8xf32>
    %110 = arith.select %107, %109, %101 : vector<1x64x8xi1>, vector<1x64x8xf32>
    %c5_i32 = arith.constant 5 : i32
    %111 = vector.broadcast %c5_i32 : i32 to vector<1x64x8xi32>
    %112 = arith.cmpi eq, %72, %111 : vector<1x64x8xi32>
    %cst_25 = arith.constant 1.280000e+02 : f32
    %113 = vector.broadcast %cst_25 : f32 to vector<1x64x1xf32>
    %114 = arith.cmpf one, %59, %113 : vector<1x64x1xf32>
    %115 = vector.broadcast %114 : vector<1x64x1xi1> to vector<1x64x8xi1>
    %116 = arith.andi %112, %115 : vector<1x64x8xi1>
    %117 = vector.shape_cast %59 : vector<1x64x1xf32> to vector<1x64x1xf32>
    %118 = vector.broadcast %117 : vector<1x64x1xf32> to vector<1x64x8xf32>
    %119 = arith.select %116, %118, %110 : vector<1x64x8xi1>, vector<1x64x8xf32>
    %c6_i32 = arith.constant 6 : i32
    %120 = vector.broadcast %c6_i32 : i32 to vector<1x64x8xi32>
    %121 = arith.cmpi eq, %72, %120 : vector<1x64x8xi32>
    %cst_26 = arith.constant 1.280000e+02 : f32
    %122 = vector.broadcast %cst_26 : f32 to vector<1x64x1xf32>
    %123 = arith.cmpf one, %65, %122 : vector<1x64x1xf32>
    %124 = vector.broadcast %123 : vector<1x64x1xi1> to vector<1x64x8xi1>
    %125 = arith.andi %121, %124 : vector<1x64x8xi1>
    %126 = vector.shape_cast %65 : vector<1x64x1xf32> to vector<1x64x1xf32>
    %127 = vector.broadcast %126 : vector<1x64x1xf32> to vector<1x64x8xf32>
    %128 = arith.select %125, %127, %119 : vector<1x64x8xi1>, vector<1x64x8xf32>
    %c7_i32 = arith.constant 7 : i32
    %129 = vector.broadcast %c7_i32 : i32 to vector<1x64x8xi32>
    %130 = arith.cmpi eq, %72, %129 : vector<1x64x8xi32>
    %cst_27 = arith.constant 1.280000e+02 : f32
    %131 = vector.broadcast %cst_27 : f32 to vector<1x64x1xf32>
    %132 = arith.cmpf one, %71, %131 : vector<1x64x1xf32>
    %133 = vector.broadcast %132 : vector<1x64x1xi1> to vector<1x64x8xi1>
    %134 = arith.andi %130, %133 : vector<1x64x8xi1>
    %135 = vector.shape_cast %71 : vector<1x64x1xf32> to vector<1x64x1xf32>
    %136 = vector.broadcast %135 : vector<1x64x1xf32> to vector<1x64x8xf32>
    %137 = arith.select %134, %136, %128 : vector<1x64x8xi1>, vector<1x64x8xf32>
    %138 = arith.fptosi %137 : vector<1x64x8xf32> to vector<1x64x8xi32>
    %c0_28 = arith.constant 0 : index
    %c0_29 = arith.constant 0 : index
    %c0_30 = arith.constant 0 : index
    %139 = vector.load %arg4[%c0_28, %c0_29, %c0_30] : memref<1x64x8xi32, #tpu.memory_space<vmem>>, vector<1x64x8xi32>
    tpu.vector_store %arg4[%c0_28, %c0_29, %c0_30], %138 {strides = array<i32>} : memref<1x64x8xi32, #tpu.memory_space<vmem>>, vector<1x64x8xi32>,
    return
  }
  func.func @transform_0(%arg0: i32, %arg1: i32) -> (i32, i32, i32) {
    %c0_i32 = arith.constant 0 : i32
    %c0_i32_0 = arith.constant 0 : i32
    return %arg0, %arg1, %c0_i32 : i32, i32, i32
  }
  func.func @transform_1(%arg0: i32, %arg1: i32) -> (i32, i32, i32) {
    %c0_i32 = arith.constant 0 : i32
    %c0_i32_0 = arith.constant 0 : i32
    %c0_i32_1 = arith.constant 0 : i32
    return %arg0, %c0_i32, %c0_i32_0 : i32, i32, i32
  }
  func.func @transform_2(%arg0: i32, %arg1: i32) -> (i32, i32, i32) {
    %c0_i32 = arith.constant 0 : i32
    %c0_i32_0 = arith.constant 0 : i32
    return %arg0, %arg1, %c0_i32 : i32, i32, i32
  }
}

</mosaic_0001>

<llo_original>
// kernel: tpu_custom_call.1
$region0: #{tpu_custom_call.1}
  #allocation0 [shape = 'u32[]', space=smem, size = 0x4, offset = 0x4, fixed_abs, tag = 'smem constant byte address 0x4 - core index']
  #allocation1 [shape = 'u32[144,128]{1,0:T(1,128)}', space=vmem, size = 0x12000, scoped, tag = 'internal scratch']
  %s0 = inlined_call_operand.vmem [shape: f32[2,64,3], index: 0, kind: input, shape index: {}]
  %s1 = inlined_call_operand.vmem [shape: f32[2,3,128], index: 1, kind: input, shape index: {}]
  %s2 = inlined_call_operand.vmem [shape: s32[2,64,8], index: 2, kind: output, shape index: {}]
  %s3 = sld [smem:[#allocation0]]
  $region41: #{tpu_custom_call.1} parent=0
    _
  %s5 = ssub.s32 1, %s3
  %s6 = scalar_select 0, %s5, %s3
  loop: start=0, step=1, limit=4
  $region2: #{tpu_custom_call.1} parent=0 // loop_pre_header
    _
  $region3: #{tpu_custom_call.1} parent=0 // loop_header
    %s8 = sphi 0, %s12
    %p9 = scmp.ge.s32.totalorder %s8, 4
    %s15 = sphi 0, %s27
    %s16 = sphi 0, %s23
    %s17 = sphi 0, %s15
    %s18 = sphi 0, %s16
    %s19 = sphi 0, %s17
    %s20 = sphi 0, %s18
    %s32 = sphi 0, %s34
    %s35 = sphi 0, %s32
    %s36 = sphi 0, %s35
    %s52 = sphi 0, %s36
    %s58 = sphi 0, %s60
    %s61 = sphi 0, %s58
    %s62 = sphi 0, %s61
    %s78 = sphi 0, %s62
    %s86 = sphi 0, %s88
    %s89 = sphi 0, %s86
    %s90 = sphi 0, %s89
    %s106 = sphi 0, %s90
  $region4: #{tpu_custom_call.1} parent=0 // loop_header_branch
    %11 = sbr.rel (%p9) target = $region8
  $region5: #{tpu_custom_call.1} parent=0 // loop_body
    %s13 = ssub.s32 %s8, 1
    %s14 = ssub.s32 %s8, 2
    %s21 = sadd.s32 1, %s16
    %p22 = scmp.ge.s32.totalorder %s21, 1
    %s23 = scalar_select %p22, 0, %s21
    %s24 = sadd.s32 1, %s15
    %s25 = scalar_select %p22, %s24, %s15
    %p26 = scmp.ge.s32.totalorder %s25, 2
    %s27 = scalar_select %p26, 0, %s25
    %s28 = ssub.s32 %s15, %s27
    %s29 = ssub.s32 %s16, %s23
    %s30 = sor.u32 %s28, %s29
    %p31 = scmp.eq.s32.totalorder %s30, 0
    %s33 = sadd.s32 %s32, 1
    %s34 = scalar_select %p31, %s32, %s33
    %p37 = pneg %p31
    %p38 = scmp.eq.s32.totalorder %s8, 1
    %p39 = por %p37, %p38
    %p40 = scmp.ne.s32.totalorder %s32, %s35
    %p41 = scmp.eq.s32.totalorder %s8, 0
    %p42 = por %p40, %p41
    %p43 = scmp.ne.s32.totalorder %s32, %s35
    %p44 = scmp.eq.s32.totalorder %s13, 1
    %p45 = por %p43, %p44
    %p46 = scmp.ne.s32.totalorder %s35, %s36
    %p47 = scmp.eq.s32.totalorder %s13, 0
    %p48 = por %p46, %p47
    %p49 = scmp.ne.s32.totalorder %s35, %s36
    %p50 = scmp.eq.s32.totalorder %s14, 1
    %p51 = por %p49, %p50
    %p53 = scmp.ne.s32.totalorder %s36, %s52
    %p54 = scmp.eq.s32.totalorder %s14, 0
    %p55 = por %p53, %p54
    %s56 = ssub.s32 %s15, %s27
    %p57 = scmp.eq.s32.totalorder %s56, 0
    %s59 = sadd.s32 %s58, 1
    %s60 = scalar_select %p57, %s58, %s59
    %p63 = pneg %p57
    %p64 = scmp.eq.s32.totalorder %s8, 1
    %p65 = por %p63, %p64
    %p66 = scmp.ne.s32.totalorder %s58, %s61
    %p67 = scmp.eq.s32.totalorder %s8, 0
    %p68 = por %p66, %p67
    %p69 = scmp.ne.s32.totalorder %s58, %s61
    %p70 = scmp.eq.s32.totalorder %s13, 1
    %p71 = por %p69, %p70
    %p72 = scmp.ne.s32.totalorder %s61, %s62
    %p73 = scmp.eq.s32.totalorder %s13, 0
    %p74 = por %p72, %p73
    %p75 = scmp.ne.s32.totalorder %s61, %s62
    %p76 = scmp.eq.s32.totalorder %s14, 1
    %p77 = por %p75, %p76
    %p79 = scmp.ne.s32.totalorder %s62, %s78
    %p80 = scmp.eq.s32.totalorder %s14, 0
    %p81 = por %p79, %p80
    %s82 = ssub.s32 %s15, %s27
    %s83 = ssub.s32 %s16, %s23
    %s84 = sor.u32 %s82, %s83
    %p85 = scmp.eq.s32.totalorder %s84, 0
    %s87 = sadd.s32 %s86, 1
    %s88 = scalar_select %p85, %s86, %s87
    %p91 = pneg %p85
    %p92 = scmp.eq.s32.totalorder %s8, 1
    %p93 = por %p91, %p92
    %p94 = scmp.ne.s32.totalorder %s86, %s89
    %p95 = scmp.eq.s32.totalorder %s8, 0
    %p96 = por %p94, %p95
    %p97 = scmp.ne.s32.totalorder %s86, %s89
    %p98 = scmp.eq.s32.totalorder %s13, 1
    %p99 = por %p97, %p98
    %p100 = scmp.ne.s32.totalorder %s89, %s90
    %p101 = scmp.eq.s32.totalorder %s13, 0
    %p102 = por %p100, %p101
    %p103 = scmp.ne.s32.totalorder %s89, %s90
    %p104 = scmp.eq.s32.totalorder %s14, 1
    %p105 = por %p103, %p104
    %p107 = scmp.ne.s32.totalorder %s90, %s106
    %p108 = scmp.eq.s32.totalorder %s14, 0
    %p109 = por %p107, %p108
    %p110 = scmp.le.s32.totalorder 1, %s8
    %p111 = scmp.lt.s32.totalorder %s8, 3
    %p112 = pnand %p110, %p111
    %p113 = pneg %p112
    // Predicated region
    $region9: #{tpu_custom_call.1} parent=5 // pred_check
      _
    $region10: #{tpu_custom_call.1} parent=5 // pred_check_branch
      %115 = sbr.rel (%p112) target = $region12
    $region11: #{tpu_custom_call.1} parent=5 // pred_region
      %s116 = ssub.s32 %s8, 1
    $region12: #{tpu_custom_call.1} parent=5 // pred_fallthru
      _
    %p117 = scmp.lt.s32.totalorder %s8, 2
    // Predicated region
    $region13: #{tpu_custom_call.1} parent=5 // pred_check
      %p118 = pneg %p117
    $region14: #{tpu_custom_call.1} parent=5 // pred_check_branch
      %120 = sbr.rel (%p118) target = $region16
    $region15: #{tpu_custom_call.1} parent=5 // pred_region
      // Predicated region
      $region17: #{tpu_custom_call.1} parent=15 // pred_check
        %p121 = pneg %p42
      $region18: #{tpu_custom_call.1} parent=15 // pred_check_branch
        %123 = sbr.rel (%p121) target = $region20
      $region19: #{tpu_custom_call.1} parent=15 // pred_region
        %s124 = smul.u32 8, %s16
        %p125 = scmp.lt.s32.totalorder %s15, 1
        %s126 = scalar_select %p125, %s15, 1
        %p127 = scmp.lt.s32.totalorder %s124, 7
        %s128 = scalar_select %p127, %s124, 7
        %s129 = smul.addr %s126, 8
        %s130 = sadd.s32 %s128, %s129
        %s131 = smul.addr %s130, 8
        %s132 = scalar_lea.vmem %s0, %s131
        %s133 = smul.u32 8, %s16
      $region20: #{tpu_custom_call.1} parent=15 // pred_fallthru
        _
      // Predicated region
      $region21: #{tpu_custom_call.1} parent=15 // pred_check
        %p134 = pneg %p68
      $region22: #{tpu_custom_call.1} parent=15 // pred_check_branch
        %136 = sbr.rel (%p134) target = $region24
      $region23: #{tpu_custom_call.1} parent=15 // pred_region
        %p137 = scmp.lt.s32.totalorder %s15, 1
        %s138 = scalar_select %p137, %s15, 1
        %s139 = smul.addr %s138, 4
        %s140 = scalar_lea.vmem %s1, %s139
      $region24: #{tpu_custom_call.1} parent=15 // pred_fallthru
        _
    $region16: #{tpu_custom_call.1} parent=5 // pred_fallthru
      _
    %p141 = scmp.le.s32.totalorder 1, %s8
    %p142 = scmp.lt.s32.totalorder %s8, 3
    %p143 = pnand %p141, %p142
    %p144 = pneg %p143
    // Predicated region
    $region25: #{tpu_custom_call.1} parent=5 // pred_check
      _
    $region26: #{tpu_custom_call.1} parent=5 // pred_check_branch
      %146 = sbr.rel (%p143) target = $region28
    $region27: #{tpu_custom_call.1} parent=5 // pred_region
      %s147 = ssub.s32 %s8, 1
      %s148 = smul.u32 8, %s18
      %p149 = scmp.lt.s32.totalorder %s17, 1
      %s150 = scalar_select %p149, %s17, 1
      %p151 = scmp.lt.s32.totalorder %s148, 7
      %s152 = scalar_select %p151, %s148, 7
      %s153 = smul.addr %s150, 8
      %s154 = sadd.s32 %s152, %s153
      %s155 = smul.addr %s154, 8
      %s156 = scalar_lea.vmem %s0, %s155
      %p157 = pneg %p48
      %p158 = pneg %p45
      %p159 = scmp.lt.s32.totalorder %s17, 1
      %s160 = scalar_select %p159, %s17, 1
      %s161 = smul.addr %s160, 4
      %s162 = scalar_lea.vmem %s1, %s161
      %p163 = pneg %p74
      %p164 = pneg %p71
      %p165 = pneg %p102
      %p166 = pneg %p99
      %s167 = smul.u32 8, %s18
      %p168 = scmp.lt.s32.totalorder %s17, 1
      %s169 = scalar_select %p168, %s17, 1
      %p170 = scmp.lt.s32.totalorder %s167, 7
      %s171 = scalar_select %p170, %s167, 7
      %s172 = smul.addr %s169, 8
      %s173 = sadd.s32 %s171, %s172
      %s174 = smul.addr %s173, 8
      %s175 = scalar_lea.vmem %s2, %s174
      %s176 = smul.u32 8, %s18
      %p177 = scmp.lt.s32.totalorder %s17, 1
      %s178 = scalar_select %p177, %s17, 1
      %p179 = scmp.lt.s32.totalorder %s176, 7
      %s180 = scalar_select %p179, %s176, 7
      %s181 = smul.addr %s178, 8
      %s182 = sadd.s32 %s180, %s181
      %s183 = smul.addr %s182, 8
      %s184 = scalar_lea.vmem %s0, %s183
      %s185 = smul.u32 8, %s18
      %p186 = scmp.lt.s32.totalorder %s17, 1
      %s187 = scalar_select %p186, %s17, 1
      %s188 = smul.addr %s187, 4
      %s189 = scalar_lea.vmem %s1, %s188
      %s190 = smul.u32 8, %s18
      %p191 = scmp.lt.s32.totalorder %s17, 1
      %s192 = scalar_select %p191, %s17, 1
      %p193 = scmp.lt.s32.totalorder %s190, 7
      %s194 = scalar_select %p193, %s190, 7
      %s195 = smul.addr %s192, 8
      %s196 = sadd.s32 %s194, %s195
      %s197 = smul.addr %s196, 8
      %s198 = scalar_lea.vmem %s2, %s197
      %s199 = smul.u32 8, %s18
      %v200 = vld [vmem:[%s184] sm:$0xff]
      %v201 = vld [vmem:[%s184 + $0x8] sm:$0xff]
      %v202 = vld [vmem:[%s184 + $0x10] sm:$0xff]
      %v203 = vld [vmem:[%s184 + $0x18] sm:$0xff]
      %v204 = vld [vmem:[%s184 + $0x20] sm:$0xff]
      %v205 = vld [vmem:[%s184 + $0x28] sm:$0xff]
      %v206 = vld [vmem:[%s184 + $0x30] sm:$0xff]
      %v207 = vld [vmem:[%s184 + $0x38] sm:$0xff]
      %v208 = vld [vmem:[%s189] sm:$0x7]
      %210 = vset.pattern.permute.xlu0 0
      %211 = vperm.xlu0 %210, %v200
      %v212 = vpop.permute.xlu0 %211
      %215 = vset.pattern.permute.xlu0 0
      %216 = vperm.xlu0 %215, %v201
      %v217 = vpop.permute.xlu0 %216
      %220 = vset.pattern.permute.xlu0 0
      %221 = vperm.xlu0 %220, %v202
      %v222 = vpop.permute.xlu0 %221
      %225 = vset.pattern.permute.xlu0 0
      %226 = vperm.xlu0 %225, %v203
      %v227 = vpop.permute.xlu0 %226
      %230 = vset.pattern.permute.xlu0 0
      %231 = vperm.xlu0 %230, %v204
      %v232 = vpop.permute.xlu0 %231
      %235 = vset.pattern.permute.xlu0 0
      %236 = vperm.xlu0 %235, %v205
      %v237 = vpop.permute.xlu0 %236
      %240 = vset.pattern.permute.xlu0 0
      %241 = vperm.xlu0 %240, %v206
      %v242 = vpop.permute.xlu0 %241
      %245 = vset.pattern.permute.xlu0 0
      %246 = vperm.xlu0 %245, %v207
      %v247 = vpop.permute.xlu0 %246
      %v249 = vlaneseq
      %v250 = vshrl.u32 %v249, 7
      %v251 = vsub.s32 0, %v250
      %v252 = vrot.slane %v208, %v251
      %v253 = vsub.f32 %v212, %v252
      %v254 = vsub.f32 %v217, %v252
      %v255 = vsub.f32 %v222, %v252
      %v256 = vsub.f32 %v227, %v252
      %v257 = vsub.f32 %v232, %v252
      %v258 = vsub.f32 %v237, %v252
      %v259 = vsub.f32 %v242, %v252
      %v260 = vsub.f32 %v247, %v252
      %v261 = vmul.f32 %v253, %v253
      %v262 = vmul.f32 %v254, %v254
      %v263 = vmul.f32 %v255, %v255
      %v264 = vmul.f32 %v256, %v256
      %v265 = vmul.f32 %v257, %v257
      %v266 = vmul.f32 %v258, %v258
      %v267 = vmul.f32 %v259, %v259
      %v268 = vmul.f32 %v260, %v260
      %269 = vset.pattern.permute.xlu0 1
      %270 = vperm.xlu0 %269, %v200
      %v271 = vpop.permute.xlu0 %270
      %273 = vset.pattern.permute.xlu0 1
      %274 = vperm.xlu0 %273, %v201
      %v275 = vpop.permute.xlu0 %274
      %277 = vset.pattern.permute.xlu0 1
      %278 = vperm.xlu0 %277, %v202
      %v279 = vpop.permute.xlu0 %278
      %281 = vset.pattern.permute.xlu0 1
      %282 = vperm.xlu0 %281, %v203
      %v283 = vpop.permute.xlu0 %282
      %285 = vset.pattern.permute.xlu0 1
      %286 = vperm.xlu0 %285, %v204
      %v287 = vpop.permute.xlu0 %286
      %289 = vset.pattern.permute.xlu0 1
      %290 = vperm.xlu0 %289, %v205
      %v291 = vpop.permute.xlu0 %290
      %293 = vset.pattern.permute.xlu0 1
      %294 = vperm.xlu0 %293, %v206
      %v295 = vpop.permute.xlu0 %294
      %297 = vset.pattern.permute.xlu0 1
      %298 = vperm.xlu0 %297, %v207
      %v299 = vpop.permute.xlu0 %298
      %v301 = vlaneseq
      %v302 = vshrl.u32 %v301, 7
      %v303 = vsub.s32 1, %v302
      %v304 = vrot.slane %v208, %v303
      %v305 = vsub.f32 %v271, %v304
      %v306 = vsub.f32 %v275, %v304
      %v307 = vsub.f32 %v279, %v304
      %v308 = vsub.f32 %v283, %v304
      %v309 = vsub.f32 %v287, %v304
      %v310 = vsub.f32 %v291, %v304
      %v311 = vsub.f32 %v295, %v304
      %v312 = vsub.f32 %v299, %v304
      %v313 = vmul.f32 %v305, %v305
      %v314 = vmul.f32 %v306, %v306
      %v315 = vmul.f32 %v307, %v307
      %v316 = vmul.f32 %v308, %v308
      %v317 = vmul.f32 %v309, %v309
      %v318 = vmul.f32 %v310, %v310
      %v319 = vmul.f32 %v311, %v311
      %v320 = vmul.f32 %v312, %v312
      %v321 = vadd.f32 %v261, %v313
      %v322 = vadd.f32 %v262, %v314
      %v323 = vadd.f32 %v263, %v315
      %v324 = vadd.f32 %v264, %v316
      %v325 = vadd.f32 %v265, %v317
      %v326 = vadd.f32 %v266, %v318
      %v327 = vadd.f32 %v267, %v319
      %v328 = vadd.f32 %v268, %v320
      %329 = vset.pattern.permute.xlu0 2
      %330 = vperm.xlu0 %329, %v200
      %v331 = vpop.permute.xlu0 %330
      %333 = vset.pattern.permute.xlu0 2
      %334 = vperm.xlu0 %333, %v201
      %v335 = vpop.permute.xlu0 %334
      %337 = vset.pattern.permute.xlu0 2
      %338 = vperm.xlu0 %337, %v202
      %v339 = vpop.permute.xlu0 %338
      %341 = vset.pattern.permute.xlu0 2
      %342 = vperm.xlu0 %341, %v203
      %v343 = vpop.permute.xlu0 %342
      %345 = vset.pattern.permute.xlu0 2
      %346 = vperm.xlu0 %345, %v204
      %v347 = vpop.permute.xlu0 %346
      %349 = vset.pattern.permute.xlu0 2
      %350 = vperm.xlu0 %349, %v205
      %v351 = vpop.permute.xlu0 %350
      %353 = vset.pattern.permute.xlu0 2
      %354 = vperm.xlu0 %353, %v206
      %v355 = vpop.permute.xlu0 %354
      %357 = vset.pattern.permute.xlu0 2
      %358 = vperm.xlu0 %357, %v207
      %v359 = vpop.permute.xlu0 %358
      %v361 = vlaneseq
      %v362 = vshrl.u32 %v361, 7
      %v363 = vsub.s32 2, %v362
      %v364 = vrot.slane %v208, %v363
      %v365 = vsub.f32 %v331, %v364
      %v366 = vsub.f32 %v335, %v364
      %v367 = vsub.f32 %v339, %v364
      %v368 = vsub.f32 %v343, %v364
      %v369 = vsub.f32 %v347, %v364
      %v370 = vsub.f32 %v351, %v364
      %v371 = vsub.f32 %v355, %v364
      %v372 = vsub.f32 %v359, %v364
      %v373 = vmul.f32 %v365, %v365
      %v374 = vmul.f32 %v366, %v366
      %v375 = vmul.f32 %v367, %v367
      %v376 = vmul.f32 %v368, %v368
      %v377 = vmul.f32 %v369, %v369
      %v378 = vmul.f32 %v370, %v370
      %v379 = vmul.f32 %v371, %v371
      %v380 = vmul.f32 %v372, %v372
      %v381 = vadd.f32 %v321, %v373
      %v382 = vadd.f32 %v322, %v374
      %v383 = vadd.f32 %v323, %v375
      %v384 = vadd.f32 %v324, %v376
      %v385 = vadd.f32 %v325, %v377
      %v386 = vadd.f32 %v326, %v378
      %v387 = vadd.f32 %v327, %v379
      %v388 = vadd.f32 %v328, %v380
      %v389 = vlaneseq
      %v390 = vand.u32 %v389, 127
      %vm391 = vcmp.le.f32.partialorder %v381, 0.04
      %vm392 = vcmp.le.f32.partialorder %v382, 0.04
      %vm393 = vcmp.le.f32.partialorder %v383, 0.04
      %vm394 = vcmp.le.f32.partialorder %v384, 0.04
      %vm395 = vcmp.le.f32.partialorder %v385, 0.04
      %vm396 = vcmp.le.f32.partialorder %v386, 0.04
      %vm397 = vcmp.le.f32.partialorder %v387, 0.04
      %vm398 = vcmp.le.f32.partialorder %v388, 0.04
      %v399 = vcvt.s32.f32 %v390
      %v400 = vsel %vm391, %v399, 128.0
      %v401 = vsel %vm392, %v399, 128.0
      %v402 = vsel %vm393, %v399, 128.0
      %v403 = vsel %vm394, %v399, 128.0
      %v404 = vsel %vm395, %v399, 128.0
      %v405 = vsel %vm396, %v399, 128.0
      %v406 = vsel %vm397, %v399, 128.0
      %v407 = vsel %vm398, %v399, 128.0
      %408 = vmin.xlane.f32.xlu0 %v400
      %v409 = vpop.xlane.xlu0 %408
      %410 = vmin.xlane.f32.xlu0 %v401
      %v411 = vpop.xlane.xlu0 %410
      %412 = vmin.xlane.f32.xlu0 %v402
      %v413 = vpop.xlane.xlu0 %412
      %414 = vmin.xlane.f32.xlu0 %v403
      %v415 = vpop.xlane.xlu0 %414
      %416 = vmin.xlane.f32.xlu0 %v404
      %v417 = vpop.xlane.xlu0 %416
      %418 = vmin.xlane.f32.xlu0 %v405
      %v419 = vpop.xlane.xlu0 %418
      %420 = vmin.xlane.f32.xlu0 %v406
      %v421 = vpop.xlane.xlu0 %420
      %422 = vmin.xlane.f32.xlu0 %v407
      %v423 = vpop.xlane.xlu0 %422
      %vm424 = vcmp.le.f32.partialorder %v400, %v409
      %vm425 = vcmp.le.f32.partialorder %v401, %v411
      %vm426 = vcmp.le.f32.partialorder %v402, %v413
      %vm427 = vcmp.le.f32.partialorder %v403, %v415
      %vm428 = vcmp.le.f32.partialorder %v404, %v417
      %vm429 = vcmp.le.f32.partialorder %v405, %v419
      %vm430 = vcmp.le.f32.partialorder %v406, %v421
      %vm431 = vcmp.le.f32.partialorder %v407, %v423
      %v432 = vsel %vm424, 128.0, %v400
      %v433 = vsel %vm425, 128.0, %v401
      %v434 = vsel %vm426, 128.0, %v402
      %v435 = vsel %vm427, 128.0, %v403
      %v436 = vsel %vm428, 128.0, %v404
      %v437 = vsel %vm429, 128.0, %v405
      %v438 = vsel %vm430, 128.0, %v406
      %v439 = vsel %vm431, 128.0, %v407
      %440 = vmin.xlane.f32.xlu0 %v432
      %v441 = vpop.xlane.xlu0 %440
      %442 = vmin.xlane.f32.xlu0 %v433
      %v443 = vpop.xlane.xlu0 %442
      %444 = vmin.xlane.f32.xlu0 %v434
      %v445 = vpop.xlane.xlu0 %444
      %446 = vmin.xlane.f32.xlu0 %v435
      %v447 = vpop.xlane.xlu0 %446
      %448 = vmin.xlane.f32.xlu0 %v436
      %v449 = vpop.xlane.xlu0 %448
      %450 = vmin.xlane.f32.xlu0 %v437
      %v451 = vpop.xlane.xlu0 %450
      %452 = vmin.xlane.f32.xlu0 %v438
      %v453 = vpop.xlane.xlu0 %452
      %454 = vmin.xlane.f32.xlu0 %v439
      %v455 = vpop.xlane.xlu0 %454
      %vm456 = vcmp.le.f32.partialorder %v432, %v441
      %vm457 = vcmp.le.f32.partialorder %v433, %v443
      %vm458 = vcmp.le.f32.partialorder %v434, %v445
      %vm459 = vcmp.le.f32.partialorder %v435, %v447
      %vm460 = vcmp.le.f32.partialorder %v436, %v449
      %vm461 = vcmp.le.f32.partialorder %v437, %v451
      %vm462 = vcmp.le.f32.partialorder %v438, %v453
      %vm463 = vcmp.le.f32.partialorder %v439, %v455
      %v464 = vsel %vm456, 128.0, %v432
      %v465 = vsel %vm457, 128.0, %v433
      %v466 = vsel %vm458, 128.0, %v434
      %v467 = vsel %vm459, 128.0, %v435
      %v468 = vsel %vm460, 128.0, %v436
      %v469 = vsel %vm461, 128.0, %v437
      %v470 = vsel %vm462, 128.0, %v438
      %v471 = vsel %vm463, 128.0, %v439
      %472 = vmin.xlane.f32.xlu0 %v464
      %v473 = vpop.xlane.xlu0 %472
      %474 = vmin.xlane.f32.xlu0 %v465
      %v475 = vpop.xlane.xlu0 %474
      %476 = vmin.xlane.f32.xlu0 %v466
      %v477 = vpop.xlane.xlu0 %476
      %478 = vmin.xlane.f32.xlu0 %v467
      %v479 = vpop.xlane.xlu0 %478
      %480 = vmin.xlane.f32.xlu0 %v468
      %v481 = vpop.xlane.xlu0 %480
      %482 = vmin.xlane.f32.xlu0 %v469
      %v483 = vpop.xlane.xlu0 %482
      %484 = vmin.xlane.f32.xlu0 %v470
      %v485 = vpop.xlane.xlu0 %484
      %486 = vmin.xlane.f32.xlu0 %v471
      %v487 = vpop.xlane.xlu0 %486
      %vm488 = vcmp.le.f32.partialorder %v464, %v473
      %vm489 = vcmp.le.f32.partialorder %v465, %v475
      %vm490 = vcmp.le.f32.partialorder %v466, %v477
      %vm491 = vcmp.le.f32.partialorder %v467, %v479
      %vm492 = vcmp.le.f32.partialorder %v468, %v481
      %vm493 = vcmp.le.f32.partialorder %v469, %v483
      %vm494 = vcmp.le.f32.partialorder %v470, %v485
      %vm495 = vcmp.le.f32.partialorder %v471, %v487
      %v496 = vsel %vm488, 128.0, %v464
      %v497 = vsel %vm489, 128.0, %v465
      %v498 = vsel %vm490, 128.0, %v466
      %v499 = vsel %vm491, 128.0, %v467
      %v500 = vsel %vm492, 128.0, %v468
      %v501 = vsel %vm493, 128.0, %v469
      %v502 = vsel %vm494, 128.0, %v470
      %v503 = vsel %vm495, 128.0, %v471
      %504 = vmin.xlane.f32.xlu0 %v496
      %v505 = vpop.xlane.xlu0 %504
      %506 = vmin.xlane.f32.xlu0 %v497
      %v507 = vpop.xlane.xlu0 %506
      %508 = vmin.xlane.f32.xlu0 %v498
      %v509 = vpop.xlane.xlu0 %508
      %510 = vmin.xlane.f32.xlu0 %v499
      %v511 = vpop.xlane.xlu0 %510
      %512 = vmin.xlane.f32.xlu0 %v500
      %v513 = vpop.xlane.xlu0 %512
      %514 = vmin.xlane.f32.xlu0 %v501
      %v515 = vpop.xlane.xlu0 %514
      %516 = vmin.xlane.f32.xlu0 %v502
      %v517 = vpop.xlane.xlu0 %516
      %518 = vmin.xlane.f32.xlu0 %v503
      %v519 = vpop.xlane.xlu0 %518
      %vm520 = vcmp.le.f32.partialorder %v496, %v505
      %vm521 = vcmp.le.f32.partialorder %v497, %v507
      %vm522 = vcmp.le.f32.partialorder %v498, %v509
      %vm523 = vcmp.le.f32.partialorder %v499, %v511
      %vm524 = vcmp.le.f32.partialorder %v500, %v513
      %vm525 = vcmp.le.f32.partialorder %v501, %v515
      %vm526 = vcmp.le.f32.partialorder %v502, %v517
      %vm527 = vcmp.le.f32.partialorder %v503, %v519
      %v528 = vsel %vm520, 128.0, %v496
      %v529 = vsel %vm521, 128.0, %v497
      %v530 = vsel %vm522, 128.0, %v498
      %v531 = vsel %vm523, 128.0, %v499
      %v532 = vsel %vm524, 128.0, %v500
      %v533 = vsel %vm525, 128.0, %v501
      %v534 = vsel %vm526, 128.0, %v502
      %v535 = vsel %vm527, 128.0, %v503
      %536 = vmin.xlane.f32.xlu0 %v528
      %v537 = vpop.xlane.xlu0 %536
      %538 = vmin.xlane.f32.xlu0 %v529
      %v539 = vpop.xlane.xlu0 %538
      %540 = vmin.xlane.f32.xlu0 %v530
      %v541 = vpop.xlane.xlu0 %540
      %542 = vmin.xlane.f32.xlu0 %v531
      %v543 = vpop.xlane.xlu0 %542
      %544 = vmin.xlane.f32.xlu0 %v532
      %v545 = vpop.xlane.xlu0 %544
      %546 = vmin.xlane.f32.xlu0 %v533
      %v547 = vpop.xlane.xlu0 %546
      %548 = vmin.xlane.f32.xlu0 %v534
      %v549 = vpop.xlane.xlu0 %548
      %550 = vmin.xlane.f32.xlu0 %v535
      %v551 = vpop.xlane.xlu0 %550
      %vm552 = vcmp.le.f32.partialorder %v528, %v537
      %vm553 = vcmp.le.f32.partialorder %v529, %v539
      %vm554 = vcmp.le.f32.partialorder %v530, %v541
      %vm555 = vcmp.le.f32.partialorder %v531, %v543
      %vm556 = vcmp.le.f32.partialorder %v532, %v545
      %vm557 = vcmp.le.f32.partialorder %v533, %v547
      %vm558 = vcmp.le.f32.partialorder %v534, %v549
      %vm559 = vcmp.le.f32.partialorder %v535, %v551
      %v560 = vsel %vm552, 128.0, %v528
      %v561 = vsel %vm553, 128.0, %v529
      %v562 = vsel %vm554, 128.0, %v530
      %v563 = vsel %vm555, 128.0, %v531
      %v564 = vsel %vm556, 128.0, %v532
      %v565 = vsel %vm557, 128.0, %v533
      %v566 = vsel %vm558, 128.0, %v534
      %v567 = vsel %vm559, 128.0, %v535
      %568 = vmin.xlane.f32.xlu0 %v560
      %v569 = vpop.xlane.xlu0 %568
      %570 = vmin.xlane.f32.xlu0 %v561
      %v571 = vpop.xlane.xlu0 %570
      %572 = vmin.xlane.f32.xlu0 %v562
      %v573 = vpop.xlane.xlu0 %572
      %574 = vmin.xlane.f32.xlu0 %v563
      %v575 = vpop.xlane.xlu0 %574
      %576 = vmin.xlane.f32.xlu0 %v564
      %v577 = vpop.xlane.xlu0 %576
      %578 = vmin.xlane.f32.xlu0 %v565
      %v579 = vpop.xlane.xlu0 %578
      %580 = vmin.xlane.f32.xlu0 %v566
      %v581 = vpop.xlane.xlu0 %580
      %582 = vmin.xlane.f32.xlu0 %v567
      %v583 = vpop.xlane.xlu0 %582
      %vm584 = vcmp.le.f32.partialorder %v560, %v569
      %vm585 = vcmp.le.f32.partialorder %v561, %v571
      %vm586 = vcmp.le.f32.partialorder %v562, %v573
      %vm587 = vcmp.le.f32.partialorder %v563, %v575
      %vm588 = vcmp.le.f32.partialorder %v564, %v577
      %vm589 = vcmp.le.f32.partialorder %v565, %v579
      %vm590 = vcmp.le.f32.partialorder %v566, %v581
      %vm591 = vcmp.le.f32.partialorder %v567, %v583
      %v592 = vsel %vm584, 128.0, %v560
      %v593 = vsel %vm585, 128.0, %v561
      %v594 = vsel %vm586, 128.0, %v562
      %v595 = vsel %vm587, 128.0, %v563
      %v596 = vsel %vm588, 128.0, %v564
      %v597 = vsel %vm589, 128.0, %v565
      %v598 = vsel %vm590, 128.0, %v566
      %v599 = vsel %vm591, 128.0, %v567
      %600 = vmin.xlane.f32.xlu0 %v592
      %v601 = vpop.xlane.xlu0 %600
      %602 = vmin.xlane.f32.xlu0 %v593
      %v603 = vpop.xlane.xlu0 %602
      %604 = vmin.xlane.f32.xlu0 %v594
      %v605 = vpop.xlane.xlu0 %604
      %606 = vmin.xlane.f32.xlu0 %v595
      %v607 = vpop.xlane.xlu0 %606
      %608 = vmin.xlane.f32.xlu0 %v596
      %v609 = vpop.xlane.xlu0 %608
      %610 = vmin.xlane.f32.xlu0 %v597
      %v611 = vpop.xlane.xlu0 %610
      %612 = vmin.xlane.f32.xlu0 %v598
      %v613 = vpop.xlane.xlu0 %612
      %614 = vmin.xlane.f32.xlu0 %v599
      %v615 = vpop.xlane.xlu0 %614
      %vm616 = vcmp.le.f32.partialorder %v592, %v601
      %vm617 = vcmp.le.f32.partialorder %v593, %v603
      %vm618 = vcmp.le.f32.partialorder %v594, %v605
      %vm619 = vcmp.le.f32.partialorder %v595, %v607
      %vm620 = vcmp.le.f32.partialorder %v596, %v609
      %vm621 = vcmp.le.f32.partialorder %v597, %v611
      %vm622 = vcmp.le.f32.partialorder %v598, %v613
      %vm623 = vcmp.le.f32.partialorder %v599, %v615
      %v624 = vsel %vm616, 128.0, %v592
      %v625 = vsel %vm617, 128.0, %v593
      %v626 = vsel %vm618, 128.0, %v594
      %v627 = vsel %vm619, 128.0, %v595
      %v628 = vsel %vm620, 128.0, %v596
      %v629 = vsel %vm621, 128.0, %v597
      %v630 = vsel %vm622, 128.0, %v598
      %v631 = vsel %vm623, 128.0, %v599
      %632 = vmin.xlane.f32.xlu0 %v624
      %v633 = vpop.xlane.xlu0 %632
      %634 = vmin.xlane.f32.xlu0 %v625
      %v635 = vpop.xlane.xlu0 %634
      %636 = vmin.xlane.f32.xlu0 %v626
      %v637 = vpop.xlane.xlu0 %636
      %638 = vmin.xlane.f32.xlu0 %v627
      %v639 = vpop.xlane.xlu0 %638
      %640 = vmin.xlane.f32.xlu0 %v628
      %v641 = vpop.xlane.xlu0 %640
      %642 = vmin.xlane.f32.xlu0 %v629
      %v643 = vpop.xlane.xlu0 %642
      %644 = vmin.xlane.f32.xlu0 %v630
      %v645 = vpop.xlane.xlu0 %644
      %646 = vmin.xlane.f32.xlu0 %v631
      %v647 = vpop.xlane.xlu0 %646
      %vm648 = vcmp.eq.s32.totalorder %v390, 1
      %vm649 = vcmp.ne.f32.partialorder %v441, 128.0
      %vm650 = vcmp.ne.f32.partialorder %v443, 128.0
      %vm651 = vcmp.ne.f32.partialorder %v445, 128.0
      %vm652 = vcmp.ne.f32.partialorder %v447, 128.0
      %vm653 = vcmp.ne.f32.partialorder %v449, 128.0
      %vm654 = vcmp.ne.f32.partialorder %v451, 128.0
      %vm655 = vcmp.ne.f32.partialorder %v453, 128.0
      %vm656 = vcmp.ne.f32.partialorder %v455, 128.0
      %v657 = vsel %vm649, 1, 0
      %v658 = vsel %vm650, 1, 0
      %v659 = vsel %vm651, 1, 0
      %v660 = vsel %vm652, 1, 0
      %v661 = vsel %vm653, 1, 0
      %v662 = vsel %vm654, 1, 0
      %v663 = vsel %vm655, 1, 0
      %v664 = vsel %vm656, 1, 0
      %vm665 = vcmp.eq.s32.totalorder %v657, 1
      %vm666 = vcmp.eq.s32.totalorder %v658, 1
      %vm667 = vcmp.eq.s32.totalorder %v659, 1
      %vm668 = vcmp.eq.s32.totalorder %v660, 1
      %vm669 = vcmp.eq.s32.totalorder %v661, 1
      %vm670 = vcmp.eq.s32.totalorder %v662, 1
      %vm671 = vcmp.eq.s32.totalorder %v663, 1
      %vm672 = vcmp.eq.s32.totalorder %v664, 1
      %vm673 = vmand %vm648, %vm665
      %vm674 = vmand %vm648, %vm666
      %vm675 = vmand %vm648, %vm667
      %vm676 = vmand %vm648, %vm668
      %vm677 = vmand %vm648, %vm669
      %vm678 = vmand %vm648, %vm670
      %vm679 = vmand %vm648, %vm671
      %vm680 = vmand %vm648, %vm672
      %v681 = vsel %vm673, %v441, %v409
      %v682 = vsel %vm674, %v443, %v411
      %v683 = vsel %vm675, %v445, %v413
      %v684 = vsel %vm676, %v447, %v415
      %v685 = vsel %vm677, %v449, %v417
      %v686 = vsel %vm678, %v451, %v419
      %v687 = vsel %vm679, %v453, %v421
      %v688 = vsel %vm680, %v455, %v423
      %vm689 = vcmp.eq.s32.totalorder %v390, 2
      %vm690 = vcmp.ne.f32.partialorder %v473, 128.0
      %vm691 = vcmp.ne.f32.partialorder %v475, 128.0
      %vm692 = vcmp.ne.f32.partialorder %v477, 128.0
      %vm693 = vcmp.ne.f32.partialorder %v479, 128.0
      %vm694 = vcmp.ne.f32.partialorder %v481, 128.0
      %vm695 = vcmp.ne.f32.partialorder %v483, 128.0
      %vm696 = vcmp.ne.f32.partialorder %v485, 128.0
      %vm697 = vcmp.ne.f32.partialorder %v487, 128.0
      %v698 = vsel %vm690, 1, 0
      %v699 = vsel %vm691, 1, 0
      %v700 = vsel %vm692, 1, 0
      %v701 = vsel %vm693, 1, 0
      %v702 = vsel %vm694, 1, 0
      %v703 = vsel %vm695, 1, 0
      %v704 = vsel %vm696, 1, 0
      %v705 = vsel %vm697, 1, 0
      %vm706 = vcmp.eq.s32.totalorder %v698, 1
      %vm707 = vcmp.eq.s32.totalorder %v699, 1
      %vm708 = vcmp.eq.s32.totalorder %v700, 1
      %vm709 = vcmp.eq.s32.totalorder %v701, 1
      %vm710 = vcmp.eq.s32.totalorder %v702, 1
      %vm711 = vcmp.eq.s32.totalorder %v703, 1
      %vm712 = vcmp.eq.s32.totalorder %v704, 1
      %vm713 = vcmp.eq.s32.totalorder %v705, 1
      %vm714 = vmand %vm689, %vm706
      %vm715 = vmand %vm689, %vm707
      %vm716 = vmand %vm689, %vm708
      %vm717 = vmand %vm689, %vm709
      %vm718 = vmand %vm689, %vm710
      %vm719 = vmand %vm689, %vm711
      %vm720 = vmand %vm689, %vm712
      %vm721 = vmand %vm689, %vm713
      %v722 = vsel %vm714, %v473, %v681
      %v723 = vsel %vm715, %v475, %v682
      %v724 = vsel %vm716, %v477, %v683
      %v725 = vsel %vm717, %v479, %v684
      %v726 = vsel %vm718, %v481, %v685
      %v727 = vsel %vm719, %v483, %v686
      %v728 = vsel %vm720, %v485, %v687
      %v729 = vsel %vm721, %v487, %v688
      %vm730 = vcmp.eq.s32.totalorder %v390, 3
      %vm731 = vcmp.ne.f32.partialorder %v505, 128.0
      %vm732 = vcmp.ne.f32.partialorder %v507, 128.0
      %vm733 = vcmp.ne.f32.partialorder %v509, 128.0
      %vm734 = vcmp.ne.f32.partialorder %v511, 128.0
      %vm735 = vcmp.ne.f32.partialorder %v513, 128.0
      %vm736 = vcmp.ne.f32.partialorder %v515, 128.0
      %vm737 = vcmp.ne.f32.partialorder %v517, 128.0
      %vm738 = vcmp.ne.f32.partialorder %v519, 128.0
      %v739 = vsel %vm731, 1, 0
      %v740 = vsel %vm732, 1, 0
      %v741 = vsel %vm733, 1, 0
      %v742 = vsel %vm734, 1, 0
      %v743 = vsel %vm735, 1, 0
      %v744 = vsel %vm736, 1, 0
      %v745 = vsel %vm737, 1, 0
      %v746 = vsel %vm738, 1, 0
      %vm747 = vcmp.eq.s32.totalorder %v739, 1
      %vm748 = vcmp.eq.s32.totalorder %v740, 1
      %vm749 = vcmp.eq.s32.totalorder %v741, 1
      %vm750 = vcmp.eq.s32.totalorder %v742, 1
      %vm751 = vcmp.eq.s32.totalorder %v743, 1
      %vm752 = vcmp.eq.s32.totalorder %v744, 1
      %vm753 = vcmp.eq.s32.totalorder %v745, 1
      %vm754 = vcmp.eq.s32.totalorder %v746, 1
      %vm755 = vmand %vm730, %vm747
      %vm756 = vmand %vm730, %vm748
      %vm757 = vmand %vm730, %vm749
      %vm758 = vmand %vm730, %vm750
      %vm759 = vmand %vm730, %vm751
      %vm760 = vmand %vm730, %vm752
      %vm761 = vmand %vm730, %vm753
      %vm762 = vmand %vm730, %vm754
      %v763 = vsel %vm755, %v505, %v722
      %v764 = vsel %vm756, %v507, %v723
      %v765 = vsel %vm757, %v509, %v724
      %v766 = vsel %vm758, %v511, %v725
      %v767 = vsel %vm759, %v513, %v726
      %v768 = vsel %vm760, %v515, %v727
      %v769 = vsel %vm761, %v517, %v728
      %v770 = vsel %vm762, %v519, %v729
      %vm771 = vcmp.eq.s32.totalorder %v390, 4
      %vm772 = vcmp.ne.f32.partialorder %v537, 128.0
      %vm773 = vcmp.ne.f32.partialorder %v539, 128.0
      %vm774 = vcmp.ne.f32.partialorder %v541, 128.0
      %vm775 = vcmp.ne.f32.partialorder %v543, 128.0
      %vm776 = vcmp.ne.f32.partialorder %v545, 128.0
      %vm777 = vcmp.ne.f32.partialorder %v547, 128.0
      %vm778 = vcmp.ne.f32.partialorder %v549, 128.0
      %vm779 = vcmp.ne.f32.partialorder %v551, 128.0
      %v780 = vsel %vm772, 1, 0
      %v781 = vsel %vm773, 1, 0
      %v782 = vsel %vm774, 1, 0
      %v783 = vsel %vm775, 1, 0
      %v784 = vsel %vm776, 1, 0
      %v785 = vsel %vm777, 1, 0
      %v786 = vsel %vm778, 1, 0
      %v787 = vsel %vm779, 1, 0
      %vm788 = vcmp.eq.s32.totalorder %v780, 1
      %vm789 = vcmp.eq.s32.totalorder %v781, 1
      %vm790 = vcmp.eq.s32.totalorder %v782, 1
      %vm791 = vcmp.eq.s32.totalorder %v783, 1
      %vm792 = vcmp.eq.s32.totalorder %v784, 1
      %vm793 = vcmp.eq.s32.totalorder %v785, 1
      %vm794 = vcmp.eq.s32.totalorder %v786, 1
      %vm795 = vcmp.eq.s32.totalorder %v787, 1
      %vm796 = vmand %vm771, %vm788
      %vm797 = vmand %vm771, %vm789
      %vm798 = vmand %vm771, %vm790
      %vm799 = vmand %vm771, %vm791
      %vm800 = vmand %vm771, %vm792
      %vm801 = vmand %vm771, %vm793
      %vm802 = vmand %vm771, %vm794
      %vm803 = vmand %vm771, %vm795
      %v804 = vsel %vm796, %v537, %v763
      %v805 = vsel %vm797, %v539, %v764
      %v806 = vsel %vm798, %v541, %v765
      %v807 = vsel %vm799, %v543, %v766
      %v808 = vsel %vm800, %v545, %v767
      %v809 = vsel %vm801, %v547, %v768
      %v810 = vsel %vm802, %v549, %v769
      %v811 = vsel %vm803, %v551, %v770
      %vm812 = vcmp.eq.s32.totalorder %v390, 5
      %vm813 = vcmp.ne.f32.partialorder %v569, 128.0
      %vm814 = vcmp.ne.f32.partialorder %v571, 128.0
      %vm815 = vcmp.ne.f32.partialorder %v573, 128.0
      %vm816 = vcmp.ne.f32.partialorder %v575, 128.0
      %vm817 = vcmp.ne.f32.partialorder %v577, 128.0
      %vm818 = vcmp.ne.f32.partialorder %v579, 128.0
      %vm819 = vcmp.ne.f32.partialorder %v581, 128.0
      %vm820 = vcmp.ne.f32.partialorder %v583, 128.0
      %v821 = vsel %vm813, 1, 0
      %v822 = vsel %vm814, 1, 0
      %v823 = vsel %vm815, 1, 0
      %v824 = vsel %vm816, 1, 0
      %v825 = vsel %vm817, 1, 0
      %v826 = vsel %vm818, 1, 0
      %v827 = vsel %vm819, 1, 0
      %v828 = vsel %vm820, 1, 0
      %vm829 = vcmp.eq.s32.totalorder %v821, 1
      %vm830 = vcmp.eq.s32.totalorder %v822, 1
      %vm831 = vcmp.eq.s32.totalorder %v823, 1
      %vm832 = vcmp.eq.s32.totalorder %v824, 1
      %vm833 = vcmp.eq.s32.totalorder %v825, 1
      %vm834 = vcmp.eq.s32.totalorder %v826, 1
      %vm835 = vcmp.eq.s32.totalorder %v827, 1
      %vm836 = vcmp.eq.s32.totalorder %v828, 1
      %vm837 = vmand %vm812, %vm829
      %vm838 = vmand %vm812, %vm830
      %vm839 = vmand %vm812, %vm831
      %vm840 = vmand %vm812, %vm832
      %vm841 = vmand %vm812, %vm833
      %vm842 = vmand %vm812, %vm834
      %vm843 = vmand %vm812, %vm835
      %vm844 = vmand %vm812, %vm836
      %v845 = vsel %vm837, %v569, %v804
      %v846 = vsel %vm838, %v571, %v805
      %v847 = vsel %vm839, %v573, %v806
      %v848 = vsel %vm840, %v575, %v807
      %v849 = vsel %vm841, %v577, %v808
      %v850 = vsel %vm842, %v579, %v809
      %v851 = vsel %vm843, %v581, %v810
      %v852 = vsel %vm844, %v583, %v811
      %vm853 = vcmp.eq.s32.totalorder %v390, 6
      %vm854 = vcmp.ne.f32.partialorder %v601, 128.0
      %vm855 = vcmp.ne.f32.partialorder %v603, 128.0
      %vm856 = vcmp.ne.f32.partialorder %v605, 128.0
      %vm857 = vcmp.ne.f32.partialorder %v607, 128.0
      %vm858 = vcmp.ne.f32.partialorder %v609, 128.0
      %vm859 = vcmp.ne.f32.partialorder %v611, 128.0
      %vm860 = vcmp.ne.f32.partialorder %v613, 128.0
      %vm861 = vcmp.ne.f32.partialorder %v615, 128.0
      %v862 = vsel %vm854, 1, 0
      %v863 = vsel %vm855, 1, 0
      %v864 = vsel %vm856, 1, 0
      %v865 = vsel %vm857, 1, 0
      %v866 = vsel %vm858, 1, 0
      %v867 = vsel %vm859, 1, 0
      %v868 = vsel %vm860, 1, 0
      %v869 = vsel %vm861, 1, 0
      %vm870 = vcmp.eq.s32.totalorder %v862, 1
      %vm871 = vcmp.eq.s32.totalorder %v863, 1
      %vm872 = vcmp.eq.s32.totalorder %v864, 1
      %vm873 = vcmp.eq.s32.totalorder %v865, 1
      %vm874 = vcmp.eq.s32.totalorder %v866, 1
      %vm875 = vcmp.eq.s32.totalorder %v867, 1
      %vm876 = vcmp.eq.s32.totalorder %v868, 1
      %vm877 = vcmp.eq.s32.totalorder %v869, 1
      %vm878 = vmand %vm853, %vm870
      %vm879 = vmand %vm853, %vm871
      %vm880 = vmand %vm853, %vm872
      %vm881 = vmand %vm853, %vm873
      %vm882 = vmand %vm853, %vm874
      %vm883 = vmand %vm853, %vm875
      %vm884 = vmand %vm853, %vm876
      %vm885 = vmand %vm853, %vm877
      %v886 = vsel %vm878, %v601, %v845
      %v887 = vsel %vm879, %v603, %v846
      %v888 = vsel %vm880, %v605, %v847
      %v889 = vsel %vm881, %v607, %v848
      %v890 = vsel %vm882, %v609, %v849
      %v891 = vsel %vm883, %v611, %v850
      %v892 = vsel %vm884, %v613, %v851
      %v893 = vsel %vm885, %v615, %v852
      %vm894 = vcmp.eq.s32.totalorder %v390, 7
      %vm895 = vcmp.ne.f32.partialorder %v633, 128.0
      %vm896 = vcmp.ne.f32.partialorder %v635, 128.0
      %vm897 = vcmp.ne.f32.partialorder %v637, 128.0
      %vm898 = vcmp.ne.f32.partialorder %v639, 128.0
      %vm899 = vcmp.ne.f32.partialorder %v641, 128.0
      %vm900 = vcmp.ne.f32.partialorder %v643, 128.0
      %vm901 = vcmp.ne.f32.partialorder %v645, 128.0
      %vm902 = vcmp.ne.f32.partialorder %v647, 128.0
      %v903 = vsel %vm895, 1, 0
      %v904 = vsel %vm896, 1, 0
      %v905 = vsel %vm897, 1, 0
      %v906 = vsel %vm898, 1, 0
      %v907 = vsel %vm899, 1, 0
      %v908 = vsel %vm900, 1, 0
      %v909 = vsel %vm901, 1, 0
      %v910 = vsel %vm902, 1, 0
      %vm911 = vcmp.eq.s32.totalorder %v903, 1
      %vm912 = vcmp.eq.s32.totalorder %v904, 1
      %vm913 = vcmp.eq.s32.totalorder %v905, 1
      %vm914 = vcmp.eq.s32.totalorder %v906, 1
      %vm915 = vcmp.eq.s32.totalorder %v907, 1
      %vm916 = vcmp.eq.s32.totalorder %v908, 1
      %vm917 = vcmp.eq.s32.totalorder %v909, 1
      %vm918 = vcmp.eq.s32.totalorder %v910, 1
      %vm919 = vmand %vm894, %vm911
      %vm920 = vmand %vm894, %vm912
      %vm921 = vmand %vm894, %vm913
      %vm922 = vmand %vm894, %vm914
      %vm923 = vmand %vm894, %vm915
      %vm924 = vmand %vm894, %vm916
      %vm925 = vmand %vm894, %vm917
      %vm926 = vmand %vm894, %vm918
      %v927 = vsel %vm919, %v633, %v886
      %v928 = vsel %vm920, %v635, %v887
      %v929 = vsel %vm921, %v637, %v888
      %v930 = vsel %vm922, %v639, %v889
      %v931 = vsel %vm923, %v641, %v890
      %v932 = vsel %vm924, %v643, %v891
      %v933 = vsel %vm925, %v645, %v892
      %v934 = vsel %vm926, %v647, %v893
      %v935 = vcvt.f32.s32.to.zero.pseudo %v927
      %v936 = vcvt.f32.s32.to.zero.pseudo %v928
      %v937 = vcvt.f32.s32.to.zero.pseudo %v929
      %v938 = vcvt.f32.s32.to.zero.pseudo %v930
      %v939 = vcvt.f32.s32.to.zero.pseudo %v931
      %v940 = vcvt.f32.s32.to.zero.pseudo %v932
      %v941 = vcvt.f32.s32.to.zero.pseudo %v933
      %v942 = vcvt.f32.s32.to.zero.pseudo %v934
      %vm943 = vcmask 64512
      %944 = vst.msk [vmem:[%s198] sm:$0xff] %vm943, %v935
      %945 = vst.msk [vmem:[%s198 + $0x8] sm:$0xff] %vm943, %v936
      %946 = vst.msk [vmem:[%s198 + $0x10] sm:$0xff] %vm943, %v937
      %947 = vst.msk [vmem:[%s198 + $0x18] sm:$0xff] %vm943, %v938
      %948 = vst.msk [vmem:[%s198 + $0x20] sm:$0xff] %vm943, %v939
      %949 = vst.msk [vmem:[%s198 + $0x28] sm:$0xff] %vm943, %v940
      %950 = vst.msk [vmem:[%s198 + $0x30] sm:$0xff] %vm943, %v941
      %951 = vst.msk [vmem:[%s198 + $0x38] sm:$0xff] %vm943, %v942
      %s952 = smul.u32 8, %s18
      %p953 = scmp.lt.s32.totalorder %s17, 1
      %s954 = scalar_select %p953, %s17, 1
      %p955 = scmp.lt.s32.totalorder %s952, 7
      %s956 = scalar_select %p955, %s952, 7
      %s957 = smul.addr %s954, 8
      %s958 = sadd.s32 %s956, %s957
      %s959 = smul.addr %s958, 8
      %s960 = scalar_lea.vmem %s2, %s959
      // Predicated region
      $region29: #{tpu_custom_call.1} parent=27 // pred_check
        %p961 = pneg %p99
      $region30: #{tpu_custom_call.1} parent=27 // pred_check_branch
        %963 = sbr.rel (%p961) target = $region32
      $region31: #{tpu_custom_call.1} parent=27 // pred_region
        %s964 = smul.u32 8, %s18
      $region32: #{tpu_custom_call.1} parent=27 // pred_fallthru
        _
    $region28: #{tpu_custom_call.1} parent=5 // pred_fallthru
      _
    %p965 = scmp.le.s32.totalorder 2, %s8
    // Predicated region
    $region33: #{tpu_custom_call.1} parent=5 // pred_check
      %p966 = pneg %p965
    $region34: #{tpu_custom_call.1} parent=5 // pred_check_branch
      %968 = sbr.rel (%p966) target = $region36
    $region35: #{tpu_custom_call.1} parent=5 // pred_region
      %s969 = ssub.s32 %s8, 2
      // Predicated region
      $region37: #{tpu_custom_call.1} parent=35 // pred_check
        %p970 = pneg %p105
      $region38: #{tpu_custom_call.1} parent=35 // pred_check_branch
        %972 = sbr.rel (%p970) target = $region40
      $region39: #{tpu_custom_call.1} parent=35 // pred_region
        %s973 = smul.u32 8, %s20
        %p974 = scmp.lt.s32.totalorder %s19, 1
        %s975 = scalar_select %p974, %s19, 1
        %p976 = scmp.lt.s32.totalorder %s973, 7
        %s977 = scalar_select %p976, %s973, 7
        %s978 = smul.addr %s975, 8
        %s979 = sadd.s32 %s977, %s978
        %s980 = smul.addr %s979, 8
        %s981 = scalar_lea.vmem %s2, %s980
      $region40: #{tpu_custom_call.1} parent=35 // pred_fallthru
        _
    $region36: #{tpu_custom_call.1} parent=5 // pred_fallthru
      _
  $region6: #{tpu_custom_call.1} parent=0 // loop_footer
    %s12 = sadd.s32 1, %s8
  $region7: #{tpu_custom_call.1} parent=0 // loop_footer_branch
    %7 = sbr.rel target = $region3
  $region8: #{tpu_custom_call.1} parent=0 // loop_exit
    _

</llo_original>
